<compile_context>
chip_gen: v7x
topology: tpu7x:2x2x1
jax: 0.10.0
libtpu: 0.0.40
codegen_flags: <defaults>
</compile_context>

<pallas_src>
import functools

import jax
import jax.numpy as jnp
from jax.experimental import pallas as pl
from jax.experimental.pallas import tpu as pltpu


def _round_up(x, m):
    return (x + m - 1) // m * m


def _default_vmem_limit_bytes():
    """Generation-aware scoped-VMEM limit (~75% of physical, capped)."""
    cap = None
    try:
        cap = getattr(pltpu.get_tpu_info(), "vmem_capacity_bytes", None)
    except Exception:
        cap = None
    if not cap:
        return 32 * 1024 * 1024          # safe on every generation
    return int(min(cap * 3 // 4, 100 * 1024 * 1024))   # v7x ~48 MiB, v5e/v6e ~96 MiB


def _num_tensorcores():
    """Best-effort TensorCore count (v7x has 2 per chip, v5e/v6e have 1)."""
    try:
        info = pltpu.get_tpu_info()
        for attr in ("num_cores", "tensorcore_count", "core_count", "num_tensorcores"):
            v = getattr(info, attr, None)
            if isinstance(v, int) and v > 0:
                return v
    except Exception:
        pass
    return 1


_MAX_CHUNKS = 64          # cap on unrolled 128-lane chunks per grid step


def _max_tile_cols(bn, tc, hw, itemsize, limit):
    """Largest legal H*W tile (lanes) that fits the VMEM budget, accounting for
    2x double-buffering of the streamed block, the psum scratch, the per-chunk
    f32 temp and the (small) resident weights."""
    psum = bn * tc * 128 * 4
    chunk_tmp = bn * tc * 128 * 4
    w1_res = 2 * max(tc, 8) * 128 * 4
    misc = 1 * 1024 * 1024              # w2t, y1 scratch, output, compiler slack
    avail = limit - (psum + chunk_tmp + w1_res + misc)
    if avail <= 0:
        return 0
    cols = avail // (2 * bn * tc * itemsize)
    cols = min(cols, _MAX_CHUNKS * 128)
    if cols >= _round_up(hw, 128):
        return hw                        # whole extent in one step (full-extent block)
    tile = (cols // 128) * 128
    if tile == 0:
        return 0
    if hw % 128 == 0:
        return min(tile, hw)
    return min(tile, (hw // 128) * 128)  # masked partial last tile


def _pick_blocks(C, hw, bn, itemsize, limit, c_block, tile_hw):
    """Choose (channel block tc, H*W tile) self-consistently with the pipeline."""
    if c_block is not None:
        assert c_block == C or (c_block % 8 == 0 and C % c_block == 0), \
            "c_block must equal C or be a multiple of 8 dividing C"
        c_cands = [c_block]
    else:
        c_cands = [C] + [tc for tc in (256, 128, 64, 32, 16, 8)
                         if tc < C and C % tc == 0]
    chosen = None
    for tc in c_cands:
        t = _max_tile_cols(bn, tc, hw, itemsize, limit)
        if t >= min(hw, 128):
            chosen = (tc, t)
            break
    if chosen is None:                   # last resort: smallest blocks
        chosen = (c_cands[-1], min(hw, 128))
    tc, tile = chosen
    if tile_hw is not None:
        assert tile_hw == hw or (tile_hw % 128 == 0 and tile_hw <= hw), \
            "tile_hw must be the full H*W extent or a multiple of 128 <= H*W"
        tile = tile_hw
    return tc, tile


def _se_kernel(x_ref, w1t_ref, w2t_ref, o_ref, psum_ref, y1_ref, *,
               tile, p_lanes, tail_valid, inv_hw):
    # x_ref   : (bn, tc, tile)   native-dtype block of activations
    # w1t_ref : (tc, N)  f32     channel-block slice of w1.T
    # w2t_ref : (N, N)   f32     resident transposed second 1x1-conv weight
    # o_ref   : (bn, N)          output block (x.dtype)
    # psum_ref: (bn, tc, p_lanes) f32 lane-wise partial sums (per H*W sweep)
    # y1_ref  : (bn, N)  f32     first-conv accumulator across channel blocks
    c = pl.program_id(1)
    k = pl.program_id(2)
    last_c = pl.num_programs(1) - 1
    last_k = pl.num_programs(2) - 1

    @pl.when(k == 0)
    def _():
        psum_ref[...] = jnp.zeros_like(psum_ref)

    n_chunks = tile // p_lanes

    def accumulate(valid):
        # Per-chunk native->f32 cast; no full-tile f32 temporary. `valid` is a
        # compile-time constant, so masking/skipping is resolved at trace time.
        acc = None
        for j in range(n_chunks):
            lo = j * p_lanes
            if lo >= valid:
                break                                   # chunk fully out of range
            chunk = x_ref[:, :, lo:lo + p_lanes].astype(jnp.float32)
            if lo + p_lanes > valid:                    # boundary chunk of the tail
                lane = jax.lax.broadcasted_iota(jnp.int32, chunk.shape, 2)
                chunk = jnp.where(lane < (valid - lo), chunk, 0.0)
            acc = chunk if acc is None else acc + chunk
        psum_ref[...] += acc

    if tail_valid == tile:
        accumulate(tile)                                # no ragged tail at all
    else:
        @pl.when(k < last_k)
        def _():
            accumulate(tile)                            # unmasked fast path

        @pl.when(k == last_k)
        def _():
            accumulate(tail_valid)                      # statically-masked tail

    # Finalize this channel block: pool -> partial first 1x1 conv; on the last
    # channel block also ReLU -> second 1x1 conv -> hardsigmoid -> store.
    @pl.when(k == last_k)
    def _():
        pooled = jnp.sum(psum_ref[...], axis=-1, keepdims=True) * inv_hw   # (bn, tc, 1)
        # Partial first conv: sum_c pooled[b, c] * w1t[c, n]  (sublane reduce,
        # no lane relayout, no dense one-hot matmul).
        contrib = jnp.sum(pooled * w1t_ref[...][None, :, :], axis=1)       # (bn, N)

        @pl.when(c == 0)
        def _():
            y1_ref[...] = contrib

        @pl.when(c > 0)
        def _():
            y1_ref[...] += contrib

        @pl.when(c == last_c)
        def _():
            y1 = jnp.maximum(y1_ref[...], 0.0)                              # ReLU
            y2 = jnp.dot(y1, w2t_ref[...], preferred_element_type=jnp.float32)
            hs = jnp.clip((y2 + 3.0) * (1.0 / 6.0), 0.0, 1.0)               # Hardsigmoid
            o_ref[...] = hs.astype(o_ref.dtype)


def se_layer(x, w1, w2, *, tile_hw=None, c_block=None, batch_blocks=None,
             vmem_limit_bytes=None):
    """x: (N, C, H, W) any float dtype. w1: (N, C) (= conv weight (N,C,1,1)).
    w2: (N, N) (= conv weight (N,N,1,1)). Returns (N, N, 1, 1) in x.dtype."""
    dtype = x.dtype
    N, C, H, W = x.shape
    hw = H * W
    itemsize = jnp.dtype(dtype).itemsize

    vmem_limit = int(vmem_limit_bytes or _default_vmem_limit_bytes())

    # Batch split only when there are multiple TensorCores AND the per-core
    # output block keeps the sublane constraint (bn % 8 == 0 or bn == N).
    cores = _num_tensorcores()
    if batch_blocks is None:
        nb = cores if (cores > 1 and N % cores == 0 and (N // cores) % 8 == 0) else 1
    else:
        nb = int(batch_blocks)
        assert N % nb == 0 and (nb == 1 or (N // nb) % 8 == 0)
    bn = N // nb

    tc, tile = _pick_blocks(C, hw, bn, itemsize, vmem_limit, c_block, tile_hw)
    cb = C // tc
    kt = pl.cdiv(hw, tile)
    p_lanes = 128 if tile % 128 == 0 else tile
    tail_valid = hw - (kt - 1) * tile          # static: valid lanes in last tile

    # Metadata-only reshape; x is streamed in its native dtype (no HBM upcast pass).
    x3 = x.reshape(N, C, hw)
    w1t = w1.astype(jnp.float32).T             # (C, N) — stored once, blocked along C
    w2t = w2.astype(jnp.float32).T             # (N, N) — tiny resident

    kernel = functools.partial(_se_kernel, tile=tile, p_lanes=p_lanes,
                               tail_valid=tail_valid, inv_hw=1.0 / hw)

    out = pl.pallas_call(
        kernel,
        out_shape=jax.ShapeDtypeStruct((N, N), dtype),
        grid_spec=pltpu.PrefetchScalarGridSpec(
            num_scalar_prefetch=0,
            grid=(nb, cb, kt),
            in_specs=[
                pl.BlockSpec((bn, tc, tile), lambda i, c, k: (i, c, k)),  # streamed x
                pl.BlockSpec((tc, N), lambda i, c, k: (c, 0)),            # w1.T block
                pl.BlockSpec((N, N), lambda i, c, k: (0, 0)),             # resident w2.T
            ],
            out_specs=pl.BlockSpec((bn, N), lambda i, c, k: (i, 0)),
            scratch_shapes=[
                pltpu.VMEM((bn, tc, p_lanes), jnp.float32),   # lane-wise partial sums
                pltpu.VMEM((bn, N), jnp.float32),             # first-conv accumulator
            ],
        ),
        compiler_params=pltpu.CompilerParams(
            dimension_semantics=("parallel", "arbitrary", "arbitrary"),
            vmem_limit_bytes=vmem_limit,
        ),
    )(x3, w1t, w2t)

    return out.reshape(N, N, 1, 1)


def se_layer_ref(x, w1, w2):
    """Pure-JAX reference matching the PyTorch forward."""
    dtype = x.dtype
    xf = x.astype(jnp.float32)
    pooled = jnp.mean(xf, axis=(2, 3))                           # (N, C)
    y1 = jnp.maximum(pooled @ w1.astype(jnp.float32).T, 0.0)
    y2 = y1 @ w2.astype(jnp.float32).T
    hs = jnp.clip((y2 + 3.0) / 6.0, 0.0, 1.0)
    return hs.reshape(x.shape[0], x.shape[0], 1, 1).astype(dtype)


if __name__ == "__main__":
    key = jax.random.PRNGKey(0)
    kx, k1, k2, k3 = jax.random.split(key, 4)
    N, C, H, W = 2, 4, 16, 16
    x = jax.random.normal(kx, (N, C, H, W), dtype=jnp.float32)
    # Deterministic stand-ins for the torch.randn conv weights produced by foo():
    w1 = jax.random.normal(k1, (N, C), dtype=jnp.float32)   # conv weight (N, C, 1, 1)
    w2 = jax.random.normal(k2, (N, N), dtype=jnp.float32)   # conv weight (N, N, 1, 1)

    # 1) Multi-step streaming reduction over H*W (2 grid steps of 128 lanes).
    out = se_layer(x, w1, w2, tile_hw=128)
    jax.block_until_ready(out)
    ref = se_layer_ref(x, w1, w2)
    assert out.shape == (N, N, 1, 1)
    assert jnp.allclose(out, ref, atol=1e-5, rtol=1e-5)

    # 2) Native-dtype (bf16) input, auto-sized tile (full-extent single step);
    #    per-chunk f32 accumulation in-kernel.
    xb = x.astype(jnp.bfloat16)
    outb = se_layer(xb, w1, w2)
    jax.block_until_ready(outb)
    refb = se_layer_ref(xb, w1, w2)
    assert outb.dtype == jnp.bfloat16
    assert jnp.allclose(outb.astype(jnp.float32), refb.astype(jnp.float32),
                        atol=2e-2, rtol=2e-2)

    # 3) Ragged spatial size (H*W = 144, tile = 128) -> statically-masked tail
    #    applied only on the last reduction step.
    x_r = jax.random.normal(kx, (N, C, 12, 12), dtype=jnp.float32)
    out_r = se_layer(x_r, w1, w2, tile_hw=128)
    jax.block_until_ready(out_r)
    assert jnp.allclose(out_r, se_layer_ref(x_r, w1, w2), atol=1e-5, rtol=1e-5)

    # 4) Channel (row) blocking path: C = 16 split into two channel blocks of 8,
    #    exercising the cross-block first-conv accumulation.
    C4 = 16
    x4 = jax.random.normal(k3, (N, C4, H, W), dtype=jnp.float32)
    w1_4 = jax.random.normal(k1, (N, C4), dtype=jnp.float32)
    out4 = se_layer(x4, w1_4, w2, tile_hw=128, c_block=8)
    jax.block_until_ready(out4)
    assert jnp.allclose(out4, se_layer_ref(x4, w1_4, w2), atol=1e-5, rtol=1e-5)

    print("KERNEL_OK")
</pallas_src>

<mosaic_0001>
module attributes {stable_mosaic.version = 11 : i64} {
  func.func @_se_kernel(%arg0: i32, %arg1: i32, %arg2: i32, %arg3: memref<2x4x128xf32, #tpu.memory_space<vmem>>, %arg4: memref<4x2xf32, #tpu.memory_space<vmem>>, %arg5: memref<2x2xf32, #tpu.memory_space<vmem>>, %arg6: memref<2x2xf32, #tpu.memory_space<vmem>>, %arg7: memref<2x4x128xf32, #tpu.memory_space<vmem>>, %arg8: memref<2x2xf32, #tpu.memory_space<vmem>>) attributes {dimension_semantics = [#tpu.dimension_semantics<parallel>, #tpu.dimension_semantics<arbitrary>, #tpu.dimension_semantics<arbitrary>], iteration_bounds = array<i64: 1, 1, 2>, scalar_prefetch = 0 : i64, scratch_operands = 2 : i64, tpu.core_type = #tpu.core_type<tc>, window_params = [{transform_indices = @transform_0, window_bounds = array<i64: 2, 4, 128>}, {transform_indices = @transform_1, window_bounds = array<i64: 4, 2>}, {pipeline_mode = #tpu.pipeline_mode<synchronous>, transform_indices = @transform_2, window_bounds = array<i64: 2, 2>}, {transform_indices = @transform_3, window_bounds = array<i64: 2, 2>}]} {
    %c0_i32 = arith.constant 0 : i32
    %0 = arith.cmpi eq, %arg2, %c0_i32 : i32
    %1 = arith.extui %0 : i1 to i32
    %c0_i32_0 = arith.constant 0 : i32
    %2 = arith.cmpi ne, %1, %c0_i32_0 : i32
    scf.if %2 {
      %cst = arith.constant 0.000000e+00 : f32
      %10 = vector.broadcast %cst : f32 to vector<2x4x128xf32>
      %c0_10 = arith.constant 0 : index
      %c0_11 = arith.constant 0 : index
      %c0_12 = arith.constant 0 : index
      %11 = vector.load %arg7[%c0_10, %c0_11, %c0_12] : memref<2x4x128xf32, #tpu.memory_space<vmem>>, vector<2x4x128xf32>
      tpu.vector_store %arg7[%c0_10, %c0_11, %c0_12], %10 {strides = array<i32>} : memref<2x4x128xf32, #tpu.memory_space<vmem>>, vector<2x4x128xf32>,
    } else {
    }
    %c0 = arith.constant 0 : index
    %c0_1 = arith.constant 0 : index
    %c0_2 = arith.constant 0 : index
    %3 = vector.load %arg3[%c0, %c0_1, %c0_2] : memref<2x4x128xf32, #tpu.memory_space<vmem>>, vector<2x4x128xf32>
    %c0_3 = arith.constant 0 : index
    %c0_4 = arith.constant 0 : index
    %c0_5 = arith.constant 0 : index
    %4 = vector.load %arg7[%c0_3, %c0_4, %c0_5] : memref<2x4x128xf32, #tpu.memory_space<vmem>>, vector<2x4x128xf32>
    %5 = arith.addf %4, %3 : vector<2x4x128xf32>
    %c0_6 = arith.constant 0 : index
    %c0_7 = arith.constant 0 : index
    %c0_8 = arith.constant 0 : index
    %6 = vector.load %arg7[%c0_6, %c0_7, %c0_8] : memref<2x4x128xf32, #tpu.memory_space<vmem>>, vector<2x4x128xf32>
    tpu.vector_store %arg7[%c0_6, %c0_7, %c0_8], %5 {strides = array<i32>} : memref<2x4x128xf32, #tpu.memory_space<vmem>>, vector<2x4x128xf32>,
    %c1_i32 = arith.constant 1 : i32
    %7 = arith.cmpi eq, %arg2, %c1_i32 : i32
    %8 = arith.extui %7 : i1 to i32
    %c0_i32_9 = arith.constant 0 : i32
    %9 = arith.cmpi ne, %8, %c0_i32_9 : i32
    scf.if %9 {
      %c0_10 = arith.constant 0 : index
      %c0_11 = arith.constant 0 : index
      %c0_12 = arith.constant 0 : index
      %10 = vector.load %arg7[%c0_10, %c0_11, %c0_12] : memref<2x4x128xf32, #tpu.memory_space<vmem>>, vector<2x4x128xf32>
      %cst = arith.constant dense<0.000000e+00> : vector<2x4xf32>
      %11 = vector.multi_reduction <add>, %10, %cst [2] : vector<2x4x128xf32> to vector<2x4xf32>
      %12 = vector.shape_cast %11 : vector<2x4xf32> to vector<2x4x1xf32>
      %cst_13 = arith.constant 3.906250e-03 : f32
      %13 = vector.broadcast %cst_13 : f32 to vector<2x4x1xf32>
      %14 = arith.mulf %12, %13 : vector<2x4x1xf32>
      %c0_14 = arith.constant 0 : index
      %c0_15 = arith.constant 0 : index
      %15 = vector.load %arg4[%c0_14, %c0_15] : memref<4x2xf32, #tpu.memory_space<vmem>>, vector<4x2xf32>
      %16 = vector.shape_cast %15 : vector<4x2xf32> to vector<1x4x2xf32>
      %17 = vector.broadcast %14 : vector<2x4x1xf32> to vector<2x4x2xf32>
      %18 = vector.broadcast %16 : vector<1x4x2xf32> to vector<2x4x2xf32>
      %19 = arith.mulf %17, %18 : vector<2x4x2xf32>
      %cst_16 = arith.constant dense<0.000000e+00> : vector<2x2xf32>
      %20 = vector.multi_reduction <add>, %19, %cst_16 [1] : vector<2x4x2xf32> to vector<2x2xf32>
      %c0_i32_17 = arith.constant 0 : i32
      %21 = arith.cmpi eq, %arg1, %c0_i32_17 : i32
      %22 = arith.extui %21 : i1 to i32
      %c0_i32_18 = arith.constant 0 : i32
      %23 = arith.cmpi ne, %22, %c0_i32_18 : i32
      scf.if %23 {
        %c0_23 = arith.constant 0 : index
        %c0_24 = arith.constant 0 : index
        %30 = vector.load %arg8[%c0_23, %c0_24] : memref<2x2xf32, #tpu.memory_space<vmem>>, vector<2x2xf32>
        tpu.vector_store %arg8[%c0_23, %c0_24], %20 {strides = array<i32>} : memref<2x2xf32, #tpu.memory_space<vmem>>, vector<2x2xf32>,
      } else {
      }
      %c0_i32_19 = arith.constant 0 : i32
      %24 = arith.cmpi sgt, %arg1, %c0_i32_19 : i32
      %25 = arith.extui %24 : i1 to i32
      %c0_i32_20 = arith.constant 0 : i32
      %26 = arith.cmpi ne, %25, %c0_i32_20 : i32
      scf.if %26 {
        %c0_23 = arith.constant 0 : index
        %c0_24 = arith.constant 0 : index
        %30 = vector.load %arg8[%c0_23, %c0_24] : memref<2x2xf32, #tpu.memory_space<vmem>>, vector<2x2xf32>
        %31 = arith.addf %30, %20 : vector<2x2xf32>
        %c0_25 = arith.constant 0 : index
        %c0_26 = arith.constant 0 : index
        %32 = vector.load %arg8[%c0_25, %c0_26] : memref<2x2xf32, #tpu.memory_space<vmem>>, vector<2x2xf32>
        tpu.vector_store %arg8[%c0_25, %c0_26], %31 {strides = array<i32>} : memref<2x2xf32, #tpu.memory_space<vmem>>, vector<2x2xf32>,
      } else {
      }
      %c0_i32_21 = arith.constant 0 : i32
      %27 = arith.cmpi eq, %arg1, %c0_i32_21 : i32
      %28 = arith.extui %27 : i1 to i32
      %c0_i32_22 = arith.constant 0 : i32
      %29 = arith.cmpi ne, %28, %c0_i32_22 : i32
      scf.if %29 {
        %c0_23 = arith.constant 0 : index
        %c0_24 = arith.constant 0 : index
        %30 = vector.load %arg8[%c0_23, %c0_24] : memref<2x2xf32, #tpu.memory_space<vmem>>, vector<2x2xf32>
        %cst_25 = arith.constant 0.000000e+00 : f32
        %31 = vector.broadcast %cst_25 : f32 to vector<2x2xf32>
        %32 = arith.maximumf %30, %31 : vector<2x2xf32>
        %c0_26 = arith.constant 0 : index
        %c0_27 = arith.constant 0 : index
        %33 = vector.load %arg5[%c0_26, %c0_27] : memref<2x2xf32, #tpu.memory_space<vmem>>, vector<2x2xf32>
        %cst_28 = arith.constant dense<0.000000e+00> : vector<2x2xf32>
        %34 = tpu.matmul %32, %33, %cst_28 {dimension_numbers = #tpu.dot_dimension_numbers<[1], [0], [0], [1], [0, 0, 1, 1], [], []>} : vector<2x2xf32>, vector<2x2xf32>, vector<2x2xf32> -> vector<2x2xf32>
        %cst_29 = arith.constant 3.000000e+00 : f32
        %35 = vector.broadcast %cst_29 : f32 to vector<2x2xf32>
        %36 = arith.addf %34, %35 : vector<2x2xf32>
        %cst_30 = arith.constant 0.166666672 : f32
        %37 = vector.broadcast %cst_30 : f32 to vector<2x2xf32>
        %38 = arith.mulf %36, %37 : vector<2x2xf32>
        %cst_31 = arith.constant 0.000000e+00 : f32
        %cst_32 = arith.constant 1.000000e+00 : f32
        %39 = vector.broadcast %cst_31 : f32 to vector<2x2xf32>
        %40 = arith.maximumf %39, %38 : vector<2x2xf32>
        %41 = vector.broadcast %cst_32 : f32 to vector<2x2xf32>
        %42 = arith.minimumf %41, %40 : vector<2x2xf32>
        %c0_33 = arith.constant 0 : index
        %c0_34 = arith.constant 0 : index
        %43 = vector.load %arg6[%c0_33, %c0_34] : memref<2x2xf32, #tpu.memory_space<vmem>>, vector<2x2xf32>
        tpu.vector_store %arg6[%c0_33, %c0_34], %42 {strides = array<i32>} : memref<2x2xf32, #tpu.memory_space<vmem>>, vector<2x2xf32>,
      } else {
      }
    } else {
    }
    return
  }
  func.func @transform_0(%arg0: i32, %arg1: i32, %arg2: i32) -> (i32, i32, i32) {
    %c0_i32 = arith.constant 0 : i32
    return %arg0, %arg1, %arg2 : i32, i32, i32
  }
  func.func @transform_1(%arg0: i32, %arg1: i32, %arg2: i32) -> (i32, i32) {
    %c0_i32 = arith.constant 0 : i32
    %c0_i32_0 = arith.constant 0 : i32
    return %arg1, %c0_i32 : i32, i32
  }
  func.func @transform_2(%arg0: i32, %arg1: i32, %arg2: i32) -> (i32, i32) {
    %c0_i32 = arith.constant 0 : i32
    %c0_i32_0 = arith.constant 0 : i32
    %c0_i32_1 = arith.constant 0 : i32
    return %c0_i32, %c0_i32_0 : i32, i32
  }
  func.func @transform_3(%arg0: i32, %arg1: i32, %arg2: i32) -> (i32, i32) {
    %c0_i32 = arith.constant 0 : i32
    %c0_i32_0 = arith.constant 0 : i32
    return %arg0, %c0_i32 : i32, i32
  }
}

</mosaic_0001>

<llo_original>
// kernel: tpu_custom_call.1
$region0: #{tpu_custom_call.1}
  #allocation0 [shape = 'u32[]', space=smem, size = 0x4, offset = 0x4, fixed_abs, tag = 'smem constant byte address 0x4 - core index']
  #allocation1 [shape = 'u32[144,128]{1,0:T(1,128)}', space=vmem, size = 0x12000, scoped, tag = 'internal scratch']
  #allocation2 [shape = 'f32[2,4,128]{2,1,0:T(4,128)}', space=vmem, size = 0x1000, scoped, tag = 'scratch operand']
  #allocation3 [shape = 'f32[2,2]{1,0:T(2,128)}', space=vmem, size = 0x400, scoped, tag = 'scratch operand']
  %s0 = inlined_call_operand.hbm [shape: f32[2,4,256], index: 0, kind: input, shape index: {}]
  %s1 = inlined_call_operand.vmem [shape: f32[4,2], index: 1, kind: input, shape index: {}]
  %s2 = inlined_call_operand.vmem [shape: f32[2,2], index: 2, kind: input, shape index: {}]
  %s3 = inlined_call_operand.hbm [shape: f32[2,2], index: 3, kind: output, shape index: {}]
  %s4 = sld [smem:[#allocation0]]
  $region69: #{tpu_custom_call.1} parent=0
    _
  %s6 = ssub.s32 1, %s4
  %s7 = scalar_select 0, %s6, %s4
  $region1: #{tpu_custom_call.1} parent=0
    #allocation4 [shape = 'u8[8192]{0}', space=vmem, size = 0x2000, scoped, tag = 'input window, operand 0']
    #allocation5 [shape = 's32[2]{0}', space=sflag, size = 0x8, scoped, tag = 'scoped memory for tpu_custom_call.1']
    #allocation6 [shape = 's32[2]{0}', space=sflag, size = 0x8, scoped, tag = 'scoped memory for tpu_custom_call.1']
    #allocation7 [shape = 'u8[1024]{0}', space=vmem, size = 0x400, scoped, tag = 'output window, operand 0, single buffered']
    %8 = vsyncpa [#allocation5], 0
    %s9 = scalar_lea.sflag [#allocation5], 1
    %10 = vsyncpa %s9, 0
    %11 = vsyncpa [#allocation6], 0
    loop: start=0, step=1, limit=4
    $region2: #{tpu_custom_call.1} parent=1 // loop_pre_header
      _
    $region3: #{tpu_custom_call.1} parent=1 // loop_header
      %s13 = sphi 0, %s17
      %p14 = scmp.ge.s32.totalorder %s13, 4
      %s20 = sphi 0, %s39
      %s21 = sphi 0, %s35
      %s22 = sphi 0, %s31
      %s23 = sphi 0, %s20
      %s24 = sphi 0, %s21
      %s25 = sphi 0, %s22
      %s26 = sphi 0, %s23
      %s27 = sphi 0, %s24
      %s28 = sphi 0, %s25
      %s46 = sphi 0, %s48
      %s49 = sphi 0, %s46
      %s50 = sphi 0, %s49
      %s66 = sphi 0, %s50
      %s72 = sphi 0, %s74
      %s75 = sphi 0, %s72
      %s76 = sphi 0, %s75
      %s92 = sphi 0, %s76
      %s96 = sphi 0, %s96
      %s98 = sphi 0, %s96
      %s99 = sphi 0, %s98
      %s113 = sphi 0, %s99
      %s119 = sphi 0, %s121
      %s122 = sphi 0, %s119
      %s123 = sphi 0, %s122
      %s139 = sphi 0, %s123
    $region4: #{tpu_custom_call.1} parent=1 // loop_header_branch
      %16 = sbr.rel (%p14) target = $region8
    $region5: #{tpu_custom_call.1} parent=1 // loop_body
      %s18 = ssub.s32 %s13, 1
      %s19 = ssub.s32 %s13, 2
      %s29 = sadd.s32 1, %s22
      %p30 = scmp.ge.s32.totalorder %s29, 2
      %s31 = scalar_select %p30, 0, %s29
      %s32 = sadd.s32 1, %s21
      %s33 = scalar_select %p30, %s32, %s21
      %p34 = scmp.ge.s32.totalorder %s33, 1
      %s35 = scalar_select %p34, 0, %s33
      %s36 = sadd.s32 1, %s20
      %s37 = scalar_select %p34, %s36, %s20
      %p38 = scmp.ge.s32.totalorder %s37, 1
      %s39 = scalar_select %p38, 0, %s37
      %s40 = ssub.s32 %s20, %s39
      %s41 = ssub.s32 %s21, %s35
      %s42 = sor.u32 %s40, %s41
      %s43 = ssub.s32 %s22, %s31
      %s44 = sor.u32 %s42, %s43
      %p45 = scmp.eq.s32.totalorder %s44, 0
      %s47 = sadd.s32 %s46, 1
      %s48 = scalar_select %p45, %s46, %s47
      %p51 = pneg %p45
      %p52 = scmp.eq.s32.totalorder %s13, 1
      %p53 = por %p51, %p52
      %p54 = scmp.ne.s32.totalorder %s46, %s49
      %p55 = scmp.eq.s32.totalorder %s13, 0
      %p56 = por %p54, %p55
      %p57 = scmp.ne.s32.totalorder %s46, %s49
      %p58 = scmp.eq.s32.totalorder %s18, 1
      %p59 = por %p57, %p58
      %p60 = scmp.ne.s32.totalorder %s49, %s50
      %p61 = scmp.eq.s32.totalorder %s18, 0
      %p62 = por %p60, %p61
      %p63 = scmp.ne.s32.totalorder %s49, %s50
      %p64 = scmp.eq.s32.totalorder %s19, 1
      %p65 = por %p63, %p64
      %p67 = scmp.ne.s32.totalorder %s50, %s66
      %p68 = scmp.eq.s32.totalorder %s19, 0
      %p69 = por %p67, %p68
      %s70 = ssub.s32 %s21, %s35
      %p71 = scmp.eq.s32.totalorder %s70, 0
      %s73 = sadd.s32 %s72, 1
      %s74 = scalar_select %p71, %s72, %s73
      %p77 = pneg %p71
      %p78 = scmp.eq.s32.totalorder %s13, 1
      %p79 = por %p77, %p78
      %p80 = scmp.ne.s32.totalorder %s72, %s75
      %p81 = scmp.eq.s32.totalorder %s13, 0
      %p82 = por %p80, %p81
      %p83 = scmp.ne.s32.totalorder %s72, %s75
      %p84 = scmp.eq.s32.totalorder %s18, 1
      %p85 = por %p83, %p84
      %p86 = scmp.ne.s32.totalorder %s75, %s76
      %p87 = scmp.eq.s32.totalorder %s18, 0
      %p88 = por %p86, %p87
      %p89 = scmp.ne.s32.totalorder %s75, %s76
      %p90 = scmp.eq.s32.totalorder %s19, 1
      %p91 = por %p89, %p90
      %p93 = scmp.ne.s32.totalorder %s76, %s92
      %p94 = scmp.eq.s32.totalorder %s19, 0
      %p95 = por %p93, %p94
      %s97 = sadd.s32 %s96, 1
      %p100 = scmp.eq.s32.totalorder %s13, 1
      %p101 = scmp.ne.s32.totalorder %s96, %s98
      %p102 = scmp.eq.s32.totalorder %s13, 0
      %p103 = por %p101, %p102
      %p104 = scmp.ne.s32.totalorder %s96, %s98
      %p105 = scmp.eq.s32.totalorder %s18, 1
      %p106 = por %p104, %p105
      %p107 = scmp.ne.s32.totalorder %s98, %s99
      %p108 = scmp.eq.s32.totalorder %s18, 0
      %p109 = por %p107, %p108
      %p110 = scmp.ne.s32.totalorder %s98, %s99
      %p111 = scmp.eq.s32.totalorder %s19, 1
      %p112 = por %p110, %p111
      %p114 = scmp.ne.s32.totalorder %s99, %s113
      %p115 = scmp.eq.s32.totalorder %s19, 0
      %p116 = por %p114, %p115
      %s117 = ssub.s32 %s20, %s39
      %p118 = scmp.eq.s32.totalorder %s117, 0
      %s120 = sadd.s32 %s119, 1
      %s121 = scalar_select %p118, %s119, %s120
      %p124 = pneg %p118
      %p125 = scmp.eq.s32.totalorder %s13, 1
      %p126 = por %p124, %p125
      %p127 = scmp.ne.s32.totalorder %s119, %s122
      %p128 = scmp.eq.s32.totalorder %s13, 0
      %p129 = por %p127, %p128
      %p130 = scmp.ne.s32.totalorder %s119, %s122
      %p131 = scmp.eq.s32.totalorder %s18, 1
      %p132 = por %p130, %p131
      %p133 = scmp.ne.s32.totalorder %s122, %s123
      %p134 = scmp.eq.s32.totalorder %s18, 0
      %p135 = por %p133, %p134
      %p136 = scmp.ne.s32.totalorder %s122, %s123
      %p137 = scmp.eq.s32.totalorder %s19, 1
      %p138 = por %p136, %p137
      %p140 = scmp.ne.s32.totalorder %s123, %s139
      %p141 = scmp.eq.s32.totalorder %s19, 0
      %p142 = por %p140, %p141
      %p143 = scmp.le.s32.totalorder 1, %s13
      %p144 = scmp.lt.s32.totalorder %s13, 3
      %p145 = pnand %p143, %p144
      %p146 = pneg %p145
      // Predicated region
      $region9: #{tpu_custom_call.1} parent=5 // pred_check
        _
      $region10: #{tpu_custom_call.1} parent=5 // pred_check_branch
        %148 = sbr.rel (%p145) target = $region12
      $region11: #{tpu_custom_call.1} parent=5 // pred_region
        %s149 = ssub.s32 %s13, 1
        // Predicated region
        $region13: #{tpu_custom_call.1} parent=11 // pred_check
          %p150 = pneg %p88
        $region14: #{tpu_custom_call.1} parent=11 // pred_check_branch
          %152 = sbr.rel (%p150) target = $region16
        $region15: #{tpu_custom_call.1} parent=11 // pred_region
          %p153 = scmp.lt.s32.totalorder %s24, 0
          %s154 = scalar_select %p153, %s24, 0
          %s155 = smul.addr %s154, 4
          %s156 = scalar_lea.vmem %s1, %s155
        $region16: #{tpu_custom_call.1} parent=11 // pred_fallthru
          _
        // Predicated region
        $region17: #{tpu_custom_call.1} parent=11 // pred_check
          %p157 = pneg %p109
        $region18: #{tpu_custom_call.1} parent=11 // pred_check_branch
          %159 = sbr.rel (%p157) target = $region20
        $region19: #{tpu_custom_call.1} parent=11 // pred_region
          _
        $region20: #{tpu_custom_call.1} parent=11 // pred_fallthru
          _
      $region12: #{tpu_custom_call.1} parent=5 // pred_fallthru
        _
      %p160 = scmp.lt.s32.totalorder %s13, 2
      // Predicated region
      $region21: #{tpu_custom_call.1} parent=5 // pred_check
        %p161 = pneg %p160
      $region22: #{tpu_custom_call.1} parent=5 // pred_check_branch
        %163 = sbr.rel (%p161) target = $region24
      $region23: #{tpu_custom_call.1} parent=5 // pred_region
        // Predicated region
        $region25: #{tpu_custom_call.1} parent=23 // pred_check
          %p164 = pneg %p56
        $region26: #{tpu_custom_call.1} parent=23 // pred_check_branch
          %166 = sbr.rel (%p164) target = $region28
        $region27: #{tpu_custom_call.1} parent=23 // pred_region
          %s167 = sand.u32 %s46, 1
          %s168 = scalar_lea.sflag [#allocation5], %s167
          %s169 = sand.u32 %s46, 1
          %s170 = smul.addr %s169, 8
          %s171 = scalar_lea.vmem [#allocation4], %s170
          %s172 = smul.u32 2, %s20
          %s174 = ssub.s32 128, 128
          %175 = vsyncadd %s168, %s174
          %s176 = smul.addr %s21, 2
          %s177 = sadd.s32 %s22, %s176
          %s178 = smul.addr %s172, 2
          %s179 = sadd.s32 %s177, %s178
          %s180 = smul.addr %s179, 64
          %s181 = scalar_lea.hbm %s0, %s180
          %s182 = sshll.u32 %s171, 4
          %s183 = int_to_ptr.vmem [resolvable:$true] %s182
          %188 = dma.hbm_to_vmem [thread:$0]  %s181, 128, %s183, %s168, 128, 64, 4
        $region28: #{tpu_custom_call.1} parent=23 // pred_fallthru
          _
      $region24: #{tpu_custom_call.1} parent=5 // pred_fallthru
        _
      %p189 = scmp.le.s32.totalorder 1, %s13
      %p190 = scmp.lt.s32.totalorder %s13, 3
      %p191 = pnand %p189, %p190
      %p192 = pneg %p191
      // Predicated region
      $region29: #{tpu_custom_call.1} parent=5 // pred_check
        _
      $region30: #{tpu_custom_call.1} parent=5 // pred_check_branch
        %194 = sbr.rel (%p191) target = $region32
      $region31: #{tpu_custom_call.1} parent=5 // pred_region
        %s195 = ssub.s32 %s13, 1
        %s196 = sand.u32 %s49, 1
        %s197 = scalar_lea.sflag [#allocation5], %s196
        %s198 = sand.u32 %s49, 1
        %s199 = smul.addr %s198, 8
        %s200 = scalar_lea.vmem [#allocation4], %s199
        // Predicated region
        $region33: #{tpu_custom_call.1} parent=31 // pred_check
          %p201 = pneg %p62
        $region34: #{tpu_custom_call.1} parent=31 // pred_check_branch
          %203 = sbr.rel (%p201) target = $region36
        $region35: #{tpu_custom_call.1} parent=31 // pred_region
          %204 = dma.done %s197, 128
        $region36: #{tpu_custom_call.1} parent=31 // pred_fallthru
          _
        %s205 = sand.u32 %s49, 1
        %s206 = scalar_lea.sflag [#allocation5], %s205
        %s207 = sand.u32 %s49, 1
        %s208 = smul.addr %s207, 8
        %s209 = scalar_lea.vmem [#allocation4], %s208
        %p210 = pneg %p62
        %p211 = pneg %p59
        %p212 = scmp.lt.s32.totalorder %s24, 0
        %s213 = scalar_select %p212, %s24, 0
        %s214 = smul.addr %s213, 4
        %s215 = scalar_lea.vmem %s1, %s214
        %p216 = pneg %p88
        %p217 = pneg %p85
        %p218 = pneg %p109
        %p219 = pneg %p106
        %p220 = pneg %p135
        %p221 = pneg %p132
        %s222 = smul.u32 2, %s23
        %p223 = scmp.lt.s32.totalorder %s24, 0
        %s224 = scalar_select %p223, %s24, 0
        %s225 = smul.addr %s224, 4
        %s226 = scalar_lea.vmem %s1, %s225
        %p227 = scmp.eq.s32.totalorder %s25, 0
        // Predicated region
        $region37: #{tpu_custom_call.1} parent=31 // pred_check
          %p228 = pneg %p227
        $region38: #{tpu_custom_call.1} parent=31 // pred_check_branch
          %230 = sbr.rel (%p228) target = $region40
        $region39: #{tpu_custom_call.1} parent=31 // pred_region
          %231 = vst [vmem:[#allocation2] sm:$0xf] 0.0
          %232 = vst [vmem:[#allocation2 + $0x4] sm:$0xf] 0.0
        $region40: #{tpu_custom_call.1} parent=31 // pred_fallthru
          _
        %v233 = vld [vmem:[%s200] sm:$0xf]
        %v234 = vld [vmem:[%s200 + $0x4] sm:$0xf]
        %v235 = vld [vmem:[#allocation2] sm:$0xf]
        %v236 = vld [vmem:[#allocation2 + $0x4] sm:$0xf]
        %v237 = vadd.f32 %v235, %v233
        %v238 = vadd.f32 %v236, %v234
        %239 = vst [vmem:[#allocation2] sm:$0xf] %v237
        %240 = vst [vmem:[#allocation2 + $0x4] sm:$0xf] %v238
        %p241 = scmp.eq.s32.totalorder %s25, 1
        // Predicated region
        $region41: #{tpu_custom_call.1} parent=31 // pred_check
          %p242 = pneg %p241
        $region42: #{tpu_custom_call.1} parent=31 // pred_check_branch
          %244 = sbr.rel (%p242) target = $region44
        $region43: #{tpu_custom_call.1} parent=31 // pred_region
          %v245 = vld [vmem:[#allocation2] sm:$0xf]
          %v246 = vld [vmem:[#allocation2 + $0x4] sm:$0xf]
          %vm247 = vcmask 1043456
          %v248 = vsel %vm247, %v245, 0.0
          %249 = vadd.xlane.f32.xlu0 %v248
          %v250 = vpop.xlane.xlu0 %249
          %v251 = vsel %vm247, %v246, 0.0
          %252 = vadd.xlane.f32.xlu0 %v251
          %v253 = vpop.xlane.xlu0 %252
          %v254 = vmul.f32 %v250, 0.00390625
          %v255 = vmul.f32 %v253, 0.00390625
          %v256 = vld [vmem:[%s226] sm:$0xf]
          %v257 = vmul.f32 %v254, %v256
          %v258 = vmul.f32 %v255, %v256
          %vm259 = vcmask 11264
          %v260 = vsel %vm259, %v257, 0.0
          %v261 = vrot.slane %v260, 4
          %v262 = vadd.f32 %v260, %v261
          %v263 = vrot.slane %v262, 2
          %v264 = vadd.f32 %v262, %v263
          %v265 = vrot.slane %v264, 1
          %v266 = vadd.f32 %v264, %v265
          %v267 = vsel %vm259, %v258, 0.0
          %v268 = vrot.slane %v267, 4
          %v269 = vadd.f32 %v267, %v268
          %v270 = vrot.slane %v269, 2
          %v271 = vadd.f32 %v269, %v270
          %v272 = vrot.slane %v271, 1
          %v273 = vadd.f32 %v271, %v272
          %p274 = scmp.eq.s32.totalorder %s24, 0
          // Predicated region
          $region45: #{tpu_custom_call.1} parent=43 // pred_check
            %p275 = pneg %p274
          $region46: #{tpu_custom_call.1} parent=43 // pred_check_branch
            %277 = sbr.rel (%p275) target = $region48
          $region47: #{tpu_custom_call.1} parent=43 // pred_region
            %vm280 = vcmask 1041409
            %v281 = vsel %vm280, %v273, %v266
            %vm283 = vcmask 9216
            %284 = vst.msk [vmem:[#allocation3] sm:$0x3] %vm283, %v281
          $region48: #{tpu_custom_call.1} parent=43 // pred_fallthru
            _
          %p285 = scmp.gt.s32.totalorder %s24, 0
          // Predicated region
          $region49: #{tpu_custom_call.1} parent=43 // pred_check
            %p286 = pneg %p285
          $region50: #{tpu_custom_call.1} parent=43 // pred_check_branch
            %288 = sbr.rel (%p286) target = $region52
          $region51: #{tpu_custom_call.1} parent=43 // pred_region
            %v289 = vld [vmem:[#allocation3] sm:$0x3]
            %vm292 = vcmask 1041409
            %v293 = vsel %vm292, %v273, %v266
            %v295 = vadd.f32 %v289, %v293
            %vm296 = vcmask 9216
            %297 = vst.msk [vmem:[#allocation3] sm:$0x3] %vm296, %v295
          $region52: #{tpu_custom_call.1} parent=43 // pred_fallthru
            _
          // Predicated region
          $region53: #{tpu_custom_call.1} parent=43 // pred_check
            %p298 = pneg %p274
          $region54: #{tpu_custom_call.1} parent=43 // pred_check_branch
            %300 = sbr.rel (%p298) target = $region56
          $region55: #{tpu_custom_call.1} parent=43 // pred_region
            %v301 = vld [vmem:[#allocation3] sm:$0x3]
            %v302 = vmax.f32 %v301, 0.0
            %v303 = vld [vmem:[%s2] sm:$0x3]
            %vm304 = vcmask 15360
            %v306 = vsel %vm304, %v302, 0
            %vm308 = vcmask 1041408
            %v310 = vsel %vm308, %v303, 0
            %312 = vmatprep.subr.mxu0 0.0
            %313 = vmatpush1.msra.mxu0 %v310
            %314 = vmatprep.subr.mxu0 0.0
            %315 = vmatpush1.msra.mxu0 0.0
            %316 = vmatprep.subr.mxu0 0.0
            %317 = vmatpush1.msra.mxu0 0.0
            %318 = vmatprep.subr.mxu0 0.0
            %319 = vmatpush1.msra.mxu0 0.0
            %320 = vmatprep.subr.mxu0 0.0
            %321 = vmatpush1.msra.mxu0 0.0
            %322 = vmatprep.subr.mxu0 0.0
            %323 = vmatpush1.msra.mxu0 0.0
            %324 = vmatprep.subr.mxu0 0.0
            %325 = vmatpush1.msra.mxu0 0.0
            %326 = vmatprep.subr.mxu0 0.0
            %327 = vmatpush1.msra.mxu0 0.0
            %328 = vmatprep.subr.mxu0 0.0
            %329 = vmatpush1.msra.mxu0 0.0
            %330 = vmatprep.subr.mxu0 0.0
            %331 = vmatpush1.msra.mxu0 0.0
            %332 = vmatprep.subr.mxu0 0.0
            %333 = vmatpush1.msra.mxu0 0.0
            %334 = vmatprep.subr.mxu0 0.0
            %335 = vmatpush1.msra.mxu0 0.0
            %336 = vmatprep.subr.mxu0 0.0
            %337 = vmatpush1.msra.mxu0 0.0
            %338 = vmatprep.subr.mxu0 0.0
            %339 = vmatpush1.msra.mxu0 0.0
            %340 = vmatprep.subr.mxu0 0.0
            %341 = vmatpush1.msra.mxu0 0.0
            %342 = vmatprep.subr.mxu0 0.0
            %343 = vmatpush1.msra.mxu0 0.0
            %344 = vmatprep.subr.mxu0 0.0
            %345 = vmatpush1.msra.mxu0 0.0
            %346 = vmatprep.subr.mxu0 0.0
            %347 = vmatpush1.msra.mxu0 0.0
            %348 = vmatprep.subr.mxu0 0.0
            %349 = vmatpush1.msra.mxu0 0.0
            %350 = vmatprep.subr.mxu0 0.0
            %351 = vmatpush1.msra.mxu0 0.0
            %352 = vmatprep.subr.mxu0 0.0
            %353 = vmatpush1.msra.mxu0 0.0
            %354 = vmatprep.subr.mxu0 0.0
            %355 = vmatpush1.msra.mxu0 0.0
            %356 = vmatprep.subr.mxu0 0.0
            %357 = vmatpush1.msra.mxu0 0.0
            %358 = vmatprep.subr.mxu0 0.0
            %359 = vmatpush1.msra.mxu0 0.0
            %360 = vmatprep.subr.mxu0 0.0
            %361 = vmatpush1.msra.mxu0 0.0
            %362 = vmatprep.subr.mxu0 0.0
            %363 = vmatpush1.msra.mxu0 0.0
            %364 = vmatprep.subr.mxu0 0.0
            %365 = vmatpush1.msra.mxu0 0.0
            %366 = vmatprep.subr.mxu0 0.0
            %367 = vmatpush1.msra.mxu0 0.0
            %368 = vmatprep.subr.mxu0 0.0
            %369 = vmatpush1.msra.mxu0 0.0
            %370 = vmatprep.subr.mxu0 0.0
            %371 = vmatpush1.msra.mxu0 0.0
            %372 = vmatprep.subr.mxu0 0.0
            %373 = vmatpush1.msra.mxu0 0.0
            %374 = vmatprep.subr.mxu0 0.0
            %375 = vmatpush1.msra.mxu0 0.0
            %376 = vmatprep.mubr.f32.mxu0 0.0
            %377 = vmatmul.mubr.f32.gmra.mrb[0].mxu0 %v306
            %v378 = vpop.f32.mrb[0].mxu0
            %v379 = vadd.f32 3.0, %v378
            %v380 = vpop.f32.mrb[0].mxu0
            %381 = vdwg.mxu0
            %v382 = vmul.f32 %v379, 0.16666667
            %v383 = vmax.f32 %v382, 0.0
            %v384 = vmin.f32 %v383, 1.0
            %vm385 = vcmask 9216
            %386 = vst.msk [vmem:[#allocation7] sm:$0x3] %vm385, %v384
          $region56: #{tpu_custom_call.1} parent=43 // pred_fallthru
            _
        $region44: #{tpu_custom_call.1} parent=31 // pred_fallthru
          _
        // Predicated region
        $region57: #{tpu_custom_call.1} parent=31 // pred_check
          %p387 = pneg %p132
        $region58: #{tpu_custom_call.1} parent=31 // pred_check_branch
          %389 = sbr.rel (%p387) target = $region60
        $region59: #{tpu_custom_call.1} parent=31 // pred_region
          %s391 = ssub.s32 32, 32
          %392 = vsyncadd [#allocation6], %s391
          %s393 = smul.addr %s23, 32
          %s394 = scalar_lea.hbm %s3, %s393
          %s396 = sshll.u32 [#allocation7], 4
          %s397 = int_to_ptr.vmem [resolvable:$true] %s396
          %399 = dma.vmem_to_hbm [thread:$0]  %s397, 32, %s394, [#allocation6]
        $region60: #{tpu_custom_call.1} parent=31 // pred_fallthru
          _
        // Predicated region
        $region61: #{tpu_custom_call.1} parent=31 // pred_check
          %p400 = pneg %p132
        $region62: #{tpu_custom_call.1} parent=31 // pred_check_branch
          %402 = sbr.rel (%p400) target = $region64
        $region63: #{tpu_custom_call.1} parent=31 // pred_region
          %403 = dma.done [#allocation6], 32
        $region64: #{tpu_custom_call.1} parent=31 // pred_fallthru
          _
      $region32: #{tpu_custom_call.1} parent=5 // pred_fallthru
        _
      %p404 = scmp.le.s32.totalorder 2, %s13
      // Predicated region
      $region65: #{tpu_custom_call.1} parent=5 // pred_check
        %p405 = pneg %p404
      $region66: #{tpu_custom_call.1} parent=5 // pred_check_branch
        %407 = sbr.rel (%p405) target = $region68
      $region67: #{tpu_custom_call.1} parent=5 // pred_region
        %s408 = ssub.s32 %s13, 2
      $region68: #{tpu_custom_call.1} parent=5 // pred_fallthru
        _
    $region6: #{tpu_custom_call.1} parent=1 // loop_footer
      %s17 = sadd.s32 1, %s13
    $region7: #{tpu_custom_call.1} parent=1 // loop_footer_branch
      %12 = sbr.rel target = $region3
    $region8: #{tpu_custom_call.1} parent=1 // loop_exit
      _
    %409 = vsyncpa [#allocation5], 1
    %s410 = scalar_lea.sflag [#allocation5], 1
    %411 = vsyncpa %s410, 1
    %412 = vsyncpa [#allocation6], 1
    %s413 = scalar_lea.sflag [#allocation6], 1
    %414 = vsyncpa %s413, 1

</llo_original>
